<compile_context>
chip_gen: v7x
topology: tpu7x:2x2x1
jax: 0.10.0
libtpu: 0.0.40
codegen_flags: <defaults>
</compile_context>

<pallas_src>
import functools

import jax
import jax.numpy as jnp
from jax.experimental import pallas as pl
from jax.experimental.pallas import tpu as pltpu


def _round_up(x, m):
    return (x + m - 1) // m * m


def _pick_tk(K):
    """Largest 128-multiple tile <= 1024 that divides K exactly; otherwise use
    the whole K as a single reduction step (full-dim blocks are always legal).
    Guarantees no K padding and no garbage along the reduction."""
    for cand in (1024, 512, 384, 256, 128):
        if K % cand == 0:
            return cand
    return K


# --------------------------------------------------------------------------
# Fused matmul kernels: (M,K) @ (K,N) + bias[N] (+ residual) (+ ReLU)
#   operands bf16, f32 VMEM accumulator, f32 epilogue, bf16/f32 store.
# --------------------------------------------------------------------------

def _mm_kernel(a_ref, b_ref, bias_ref, o_ref, acc_ref, *, relu):
    k = pl.program_id(2)

    @pl.when(k == 0)
    def _():
        acc_ref[...] = jnp.zeros_like(acc_ref)

    acc_ref[...] += jnp.dot(a_ref[...], b_ref[...],
                            preferred_element_type=jnp.float32)

    @pl.when(k == pl.num_programs(2) - 1)
    def _():
        y = acc_ref[...] + bias_ref[...]
        if relu:
            y = jnp.maximum(y, 0.0)
        o_ref[...] = y.astype(o_ref.dtype)


def _mm_res_kernel(a_ref, b_ref, bias_ref, r_ref, o_ref, acc_ref, *, relu):
    k = pl.program_id(2)

    @pl.when(k == 0)
    def _():
        acc_ref[...] = jnp.zeros_like(acc_ref)

    acc_ref[...] += jnp.dot(a_ref[...], b_ref[...],
                            preferred_element_type=jnp.float32)

    @pl.when(k == pl.num_programs(2) - 1)
    def _():
        y = acc_ref[...] + bias_ref[...] + r_ref[...].astype(jnp.float32)
        if relu:
            y = jnp.maximum(y, 0.0)
        o_ref[...] = y.astype(o_ref.dtype)


def matmul_bias_act(a, b, bias, residual=None, *, relu,
                    out_dtype=jnp.bfloat16):
    """a:(M,K) @ b:(K,N) + bias[N] (+ residual[M,N]) with optional ReLU.
    No padding; partial edge blocks are masked on writeback."""
    M, K = a.shape
    _, N = b.shape
    tm = min(256, _round_up(M, 16))          # 16: bf16 packs two rows/sublane
    tk = _pick_tk(K)
    tn = min(N, 2048)
    # Keep at least 2 parallel (i, j) blocks so both v7x TensorCores get work.
    if pl.cdiv(M, tm) == 1 and tn == N and N >= 256 and N % 256 == 0:
        tn = N // 2
    grid = (pl.cdiv(M, tm), pl.cdiv(N, tn), pl.cdiv(K, tk))
    bias2 = bias.astype(jnp.float32).reshape(1, N)

    in_specs = [
        pl.BlockSpec((tm, tk), lambda i, j, k: (i, k)),
        pl.BlockSpec((tk, tn), lambda i, j, k: (k, j)),
        pl.BlockSpec((1, tn), lambda i, j, k: (0, j)),
    ]
    args = [a, b, bias2]
    if residual is not None:
        in_specs.append(pl.BlockSpec((tm, tn), lambda i, j, k: (i, j)))
        args.append(residual)
        kernel = functools.partial(_mm_res_kernel, relu=relu)
    else:
        kernel = functools.partial(_mm_kernel, relu=relu)

    # Per-call VMEM budget: double-buffered operand/out tiles + f32 acc.
    itm = jnp.dtype(a.dtype).itemsize
    est = (2 * (tm * tk + tk * tn) * itm
           + 2 * tm * tn * jnp.dtype(out_dtype).itemsize
           + tm * tn * 4 + 2 * tn * 4)
    if residual is not None:
        est += 2 * tm * tn * jnp.dtype(residual.dtype).itemsize
    vmem_lim = int(min(48 * 1024 * 1024, max(2 * est, 16 * 1024 * 1024)))

    return pl.pallas_call(
        kernel,
        out_shape=jax.ShapeDtypeStruct((M, N), out_dtype),
        grid_spec=pltpu.PrefetchScalarGridSpec(
            num_scalar_prefetch=0,
            grid=grid,
            in_specs=in_specs,
            out_specs=pl.BlockSpec((tm, tn), lambda i, j, k: (i, j)),
            scratch_shapes=[pltpu.VMEM((tm, tn), jnp.float32)],
        ),
        compiler_params=pltpu.CompilerParams(
            dimension_semantics=("parallel", "parallel", "arbitrary"),
            vmem_limit_bytes=vmem_lim),
    )(*args)


# --------------------------------------------------------------------------
# Direct 3x3 / stride-1 / pad-1 conv + BN(bias) + ReLU   (no im2col in HBM)
#
# The padded image (Hp = H+3 rows: 1 top, 2 bottom; Wp = W+2 cols) is read as
# one flat (Hp*Wp, C) VMEM block per batch element.  For tap (i, j) the matmul
# LHS is just the row-offset slice [i*Wp + j : i*Wp + j + H*Wp), so 9 MXU
# matmuls accumulate the whole conv into an f32 scratch of shape (H*Wp, Cout);
# the garbage columns produced at the horizontal pad positions are dropped on
# the row-wise writeback into the dense NHWC output.
# --------------------------------------------------------------------------

def _conv3x3s1_kernel(x_ref, w_ref, b_ref, o_ref, acc_ref, *, Ho, Wo, Wp, relu):
    # x_ref: (Hp*Wp, C) bf16   w_ref: (9, C, Cout) bf16   b_ref: (1, Cout) f32
    # o_ref: (Ho, Wo, Cout)    acc_ref: (Ho*Wp, Cout) f32
    Mo = Ho * Wp
    for t in range(9):
        i, j = divmod(t, 3)
        a = x_ref[pl.ds(i * Wp + j, Mo), :]
        p = jnp.dot(a, w_ref[t], preferred_element_type=jnp.float32)
        if t == 0:
            acc_ref[...] = p
        else:
            acc_ref[...] += p
    bias = b_ref[...]
    for h in range(Ho):                      # static unroll: dense row stores
        y = acc_ref[pl.ds(h * Wp, Wo), :] + bias
        if relu:
            y = jnp.maximum(y, 0.0)
        o_ref[h] = y.astype(o_ref.dtype)


def conv3x3_s1_direct(x, w_mat, bias, *, relu):
    """x: (N, H, W, C) bf16, w_mat: (9*C, Cout) bf16 (BN scale pre-folded)."""
    N, H, W, C = x.shape
    Cout = w_mat.shape[1]
    Ho, Wo = H, W
    Wp, Hp = W + 2, H + 3
    Mo = Ho * Wp
    xp = jnp.pad(x, ((0, 0), (1, 2), (1, 1), (0, 0)))
    xf = xp.reshape(N, Hp * Wp, C)                 # free reshape (adjacent dims)
    w3 = w_mat.reshape(9, C, Cout)
    bias2 = bias.astype(jnp.float32).reshape(1, Cout)

    est = (2 * Hp * Wp * C * 2 + 2 * 9 * C * Cout * 2
           + Mo * Cout * 4 + 2 * Ho * Wo * Cout * 2 + 4 * Cout)
    vmem_lim = int(min(48 * 1024 * 1024, max(2 * est, 16 * 1024 * 1024)))

    kern = functools.partial(_conv3x3s1_kernel, Ho=Ho, Wo=Wo, Wp=Wp, relu=relu)
    return pl.pallas_call(
        kern,
        out_shape=jax.ShapeDtypeStruct((N, Ho, Wo, Cout), jnp.bfloat16),
        grid_spec=pltpu.PrefetchScalarGridSpec(
            num_scalar_prefetch=0,
            grid=(N,),
            in_specs=[
                pl.BlockSpec((None, Hp * Wp, C), lambda n: (n, 0, 0)),
                pl.BlockSpec((9, C, Cout), lambda n: (0, 0, 0)),
                pl.BlockSpec((1, Cout), lambda n: (0, 0)),
            ],
            out_specs=pl.BlockSpec((None, Ho, Wo, Cout),
                                   lambda n: (n, 0, 0, 0)),
            scratch_shapes=[pltpu.VMEM((Mo, Cout), jnp.float32)],
        ),
        compiler_params=pltpu.CompilerParams(
            dimension_semantics=("parallel",),
            vmem_limit_bytes=vmem_lim),
    )(xf, w3, bias2)


# --------------------------------------------------------------------------
# im2col fallback (XLA glue, bf16) for 1x1 convs (free reshape), the 7x7 stem
# and the three stride-2 3x3 convs.
# --------------------------------------------------------------------------

def _im2col(x, kh, kw, stride, pad):
    N, H, W, C = x.shape
    if pad:
        x = jnp.pad(x, ((0, 0), (pad, pad), (pad, pad), (0, 0)))
    Ho = (H + 2 * pad - kh) // stride + 1
    Wo = (W + 2 * pad - kw) // stride + 1
    if kh == 1 and kw == 1:
        patches = x[:, ::stride, ::stride, :]
        return patches.reshape(N * Ho * Wo, C), Ho, Wo
    cols = []
    for i in range(kh):
        for j in range(kw):
            cols.append(x[:, i:i + stride * (Ho - 1) + 1:stride,
                          j:j + stride * (Wo - 1) + 1:stride, :])
    patches = jnp.stack(cols, axis=3)          # (N, Ho, Wo, kh*kw, C)
    return patches.reshape(N * Ho * Wo, kh * kw * C), Ho, Wo


@functools.partial(jax.jit,
                   static_argnames=("kh", "kw", "stride", "pad", "relu"))
def conv_bn(x, w_mat, bias, residual=None, *, kh, kw, stride, pad, relu):
    """Conv2d + eval-mode BatchNorm (scale pre-folded into weights) with an
    optional fused residual-add + ReLU epilogue.  NHWC in / NHWC out (bf16)."""
    N = x.shape[0]
    if kh == 3 and kw == 3 and stride == 1 and pad == 1 and residual is None:
        return conv3x3_s1_direct(x, w_mat, bias, relu=relu)
    patches, Ho, Wo = _im2col(x, kh, kw, stride, pad)
    cout = w_mat.shape[1]
    res2 = None
    if residual is not None:
        res2 = residual.reshape(N * Ho * Wo, cout)
    out = matmul_bias_act(patches, w_mat, bias, res2, relu=relu)
    return out.reshape(N, Ho, Wo, cout)


# --------------------------------------------------------------------------
# Max pool 3x3 / stride 2 / pad 1 from the 4 even/odd row/col phases of the
# input: out[h,w] = max(A[h,w], B[h,w], B[h,w-1], C[h,w], D[h,w], D[h,w-1],
#                       C[h-1,w], D[h-1,w], D[h-1,w-1])
# (out-of-range shifted terms are simply omitted -> matches -inf padding).
# --------------------------------------------------------------------------

def _maxpool4_kernel(a_ref, b_ref, c_ref, d_ref, o_ref):
    Ho, Wo, _ = a_ref.shape
    A = a_ref[...]
    B = b_ref[...]
    Cm = c_ref[...]
    D = d_ref[...]
    m4 = jnp.maximum(jnp.maximum(A, B), jnp.maximum(Cm, D))
    mw = jnp.maximum(B, D)        # [h, w-1] contributions
    mh = jnp.maximum(Cm, D)       # [h-1, w] contributions

    o_ref[pl.ds(0, 1), pl.ds(0, 1), :] = m4[0:1, 0:1, :]
    if Wo > 1:
        o_ref[pl.ds(0, 1), pl.ds(1, Wo - 1), :] = jnp.maximum(
            m4[0:1, 1:Wo, :], mw[0:1, 0:Wo - 1, :])
    if Ho > 1:
        o_ref[pl.ds(1, Ho - 1), pl.ds(0, 1), :] = jnp.maximum(
            m4[1:Ho, 0:1, :], mh[0:Ho - 1, 0:1, :])
    if Ho > 1 and Wo > 1:
        o_ref[pl.ds(1, Ho - 1), pl.ds(1, Wo - 1), :] = jnp.maximum(
            jnp.maximum(m4[1:Ho, 1:Wo, :], mw[1:Ho, 0:Wo - 1, :]),
            jnp.maximum(mh[0:Ho - 1, 1:Wo, :], D[0:Ho - 1, 0:Wo - 1, :]))


@jax.jit
def maxpool_3x3_s2(x):
    N, H, W, C = x.shape
    assert H % 2 == 0 and W % 2 == 0, "even spatial dims expected"
    Ho, Wo = H // 2, W // 2
    A = x[:, 0::2, 0::2, :]
    B = x[:, 0::2, 1::2, :]
    Cm = x[:, 1::2, 0::2, :]
    D = x[:, 1::2, 1::2, :]
    spec = pl.BlockSpec((None, Ho, Wo, C), lambda n: (n, 0, 0, 0))
    return pl.pallas_call(
        _maxpool4_kernel,
        out_shape=jax.ShapeDtypeStruct((N, Ho, Wo, C), x.dtype),
        grid_spec=pltpu.PrefetchScalarGridSpec(
            num_scalar_prefetch=0,
            grid=(N,),
            in_specs=[spec] * 4,
            out_specs=spec),
        compiler_params=pltpu.CompilerParams(
            dimension_semantics=("parallel",)),
    )(A, B, Cm, D)


# --------------------------------------------------------------------------
# Global average pool, channel-tiled, f32 accumulation
# --------------------------------------------------------------------------

def _gap_kernel(x_ref, o_ref, *, inv_hw):
    x = x_ref[...].astype(jnp.float32)          # (N, HW, tc)
    o_ref[...] = jnp.sum(x, axis=1) * inv_hw    # (N, tc)


@jax.jit
def global_avg_pool(x):
    """AdaptiveAvgPool2d((1,1)) on NHWC -> (N, C) f32."""
    N, H, W, C = x.shape
    x2 = x.reshape(N, H * W, C)
    tc = min(512, C)
    return pl.pallas_call(
        functools.partial(_gap_kernel, inv_hw=1.0 / float(H * W)),
        out_shape=jax.ShapeDtypeStruct((N, C), jnp.float32),
        grid_spec=pltpu.PrefetchScalarGridSpec(
            num_scalar_prefetch=0,
            grid=(pl.cdiv(C, tc),),
            in_specs=[pl.BlockSpec((N, H * W, tc), lambda c: (0, 0, c))],
            out_specs=pl.BlockSpec((N, tc), lambda c: (0, c))),
        compiler_params=pltpu.CompilerParams(
            dimension_semantics=("parallel",)),
    )(x2)


# --------------------------------------------------------------------------
# Deterministic parameter construction (synthetic — no checkpoint loading)
# --------------------------------------------------------------------------

def _conv_bn_params(key, cin, cout, kh, kw):
    k1, k2, k3 = jax.random.split(key, 3)
    fan_in = cin * kh * kw
    w = jax.random.normal(k1, (cout, cin, kh, kw), jnp.float32) * \
        jnp.sqrt(2.0 / fan_in)                       # kaiming fan_in
    # (Cout, Cin, kh, kw) -> (kh*kw*Cin, Cout) to match the tap/patch layout.
    w_mat = jnp.transpose(w, (2, 3, 1, 0)).reshape(kh * kw * cin, cout)
    gamma = 1.0 + 0.05 * jax.random.normal(k2, (cout,), jnp.float32)
    beta = 0.05 * jax.random.normal(k3, (cout,), jnp.float32)
    running_mean = jnp.zeros((cout,), jnp.float32)
    running_var = jnp.ones((cout,), jnp.float32)
    eps = 1e-5
    scale = gamma / jnp.sqrt(running_var + eps)
    bias = beta - running_mean * scale
    # Fold the BN scale into the weight columns; store bf16 for MXU throughput.
    w_mat = (w_mat * scale[None, :]).astype(jnp.bfloat16)
    return {"w": w_mat, "bias": bias.astype(jnp.float32)}


_BLOCKS = {50: (3, 4, 6, 3), 101: (3, 4, 23, 3), 152: (3, 8, 36, 3)}


def make_resnet_params(key, n_class=200, model_choice=50):
    blocks = _BLOCKS[model_choice]
    keys = jax.random.split(key, 8)
    params = {"conv1": _conv_bn_params(keys[0], 3, 64, 7, 7)}
    inplanes = 64
    planes_list = (64, 128, 256, 512)
    strides = (1, 2, 2, 2)
    for li, (planes, nblocks, stride) in enumerate(
            zip(planes_list, blocks, strides)):
        lkeys = jax.random.split(keys[1 + li], nblocks)
        layer = []
        for b in range(nblocks):
            bkeys = jax.random.split(lkeys[b], 4)
            st = stride if b == 0 else 1
            blk = {
                "stride": st,
                "conv1": _conv_bn_params(bkeys[0], inplanes, planes, 1, 1),
                "conv2": _conv_bn_params(bkeys[1], planes, planes, 3, 3),
                "conv3": _conv_bn_params(bkeys[2], planes, planes * 4, 1, 1),
            }
            if st != 1 or inplanes != planes * 4:
                blk["downsample"] = _conv_bn_params(
                    bkeys[3], inplanes, planes * 4, 1, 1)
            inplanes = planes * 4
            layer.append(blk)
        params[f"layer{li + 1}"] = layer
    # fc: nn.Linear(2048, n_class) with kaiming_normal_ weight init.
    kf1, kf2 = jax.random.split(keys[5], 2)
    fan_in = 2048
    fc_w = jax.random.normal(kf1, (n_class, fan_in), jnp.float32) * \
        jnp.sqrt(2.0 / fan_in)
    bound = 1.0 / jnp.sqrt(fan_in)
    fc_b = jax.random.uniform(kf2, (n_class,), jnp.float32, -bound, bound)
    params["fc_w"] = jnp.transpose(fc_w).astype(jnp.bfloat16)  # (2048, n_class)
    params["fc_b"] = fc_b
    return params


# --------------------------------------------------------------------------
# Forward pass (matches torchvision ResNet bottleneck-v1.5 semantics)
# --------------------------------------------------------------------------

def _bottleneck(x, blk):
    st = blk["stride"]
    c1, c2, c3 = blk["conv1"], blk["conv2"], blk["conv3"]
    out = conv_bn(x, c1["w"], c1["bias"],
                  kh=1, kw=1, stride=1, pad=0, relu=True)
    out = conv_bn(out, c2["w"], c2["bias"],
                  kh=3, kw=3, stride=st, pad=1, relu=True)
    if "downsample" in blk:
        d = blk["downsample"]
        identity = conv_bn(x, d["w"], d["bias"],
                           kh=1, kw=1, stride=st, pad=0, relu=False)
    else:
        identity = x
    # conv3 with residual add + ReLU fused into the matmul epilogue.
    out = conv_bn(out, c3["w"], c3["bias"], residual=identity,
                  kh=1, kw=1, stride=1, pad=0, relu=True)
    return out


def resnet_forward(x_nchw, params):
    x = jnp.transpose(x_nchw, (0, 2, 3, 1)).astype(jnp.bfloat16)  # NCHW->NHWC
    c1 = params["conv1"]
    x = conv_bn(x, c1["w"], c1["bias"],
                kh=7, kw=7, stride=2, pad=3, relu=True)
    x = maxpool_3x3_s2(x)
    for li in range(1, 5):
        for blk in params[f"layer{li}"]:
            x = _bottleneck(x, blk)
    pooled = global_avg_pool(x)                                   # (N,2048) f32
    logits = matmul_bias_act(pooled.astype(jnp.bfloat16), params["fc_w"],
                             params["fc_b"], relu=False,
                             out_dtype=jnp.float32)
    return logits


if __name__ == "__main__":
    key = jax.random.PRNGKey(0)
    pkey, xkey = jax.random.split(key)
    # TODO(synk): pretrained ImageNet weights are not loadable here; parameters
    # are deterministic synthetic kaiming/default-BN values instead.
    params = make_resnet_params(pkey, n_class=200, model_choice=50)
    # Small input consistent with the module: NCHW, 3 input channels.
    x = jax.random.normal(xkey, (2, 3, 64, 64), jnp.float32)
    logits = resnet_forward(x, params)
    logits = jax.block_until_ready(logits)
    assert logits.shape == (2, 200), logits.shape
    assert bool(jnp.all(jnp.isfinite(logits)))
    print("KERNEL_OK")
</pallas_src>

<mosaic_0001>
module attributes {stable_mosaic.version = 11 : i64} {
  func.func @_mm_kernel(%arg0: i32, %arg1: i32, %arg2: i32, %arg3: memref<256x147xbf16, #tpu.memory_space<vmem>>, %arg4: memref<147x64xbf16, #tpu.memory_space<vmem>>, %arg5: memref<1x64xf32, #tpu.memory_space<vmem>>, %arg6: memref<256x64xbf16, #tpu.memory_space<vmem>>, %arg7: memref<256x64xf32, #tpu.memory_space<vmem>>) attributes {dimension_semantics = [#tpu.dimension_semantics<parallel>, #tpu.dimension_semantics<parallel>, #tpu.dimension_semantics<arbitrary>], iteration_bounds = array<i64: 8, 1, 1>, scalar_prefetch = 0 : i64, scratch_operands = 1 : i64, tpu.core_type = #tpu.core_type<tc>, window_params = [{transform_indices = @transform_0, window_bounds = array<i64: 256, 147>}, {transform_indices = @transform_1, window_bounds = array<i64: 147, 64>}, {transform_indices = @transform_2, window_bounds = array<i64: 1, 64>}, {transform_indices = @transform_3, window_bounds = array<i64: 256, 64>}]} {
    %c0_i32 = arith.constant 0 : i32
    %0 = arith.cmpi eq, %arg2, %c0_i32 : i32
    %1 = arith.extui %0 : i1 to i32
    %c0_i32_0 = arith.constant 0 : i32
    %2 = arith.cmpi ne, %1, %c0_i32_0 : i32
    scf.if %2 {
      %cst_10 = arith.constant 0.000000e+00 : f32
      %12 = vector.broadcast %cst_10 : f32 to vector<256x64xf32>
      %c0_11 = arith.constant 0 : index
      %c0_12 = arith.constant 0 : index
      %13 = vector.load %arg7[%c0_11, %c0_12] : memref<256x64xf32, #tpu.memory_space<vmem>>, vector<256x64xf32>
      tpu.vector_store %arg7[%c0_11, %c0_12], %12 {strides = array<i32>} : memref<256x64xf32, #tpu.memory_space<vmem>>, vector<256x64xf32>,
    } else {
    }
    %c0 = arith.constant 0 : index
    %c0_1 = arith.constant 0 : index
    %3 = vector.load %arg7[%c0, %c0_1] : memref<256x64xf32, #tpu.memory_space<vmem>>, vector<256x64xf32>
    %c0_2 = arith.constant 0 : index
    %c0_3 = arith.constant 0 : index
    %4 = vector.load %arg3[%c0_2, %c0_3] : memref<256x147xbf16, #tpu.memory_space<vmem>>, vector<256x147xbf16>
    %c0_4 = arith.constant 0 : index
    %c0_5 = arith.constant 0 : index
    %5 = vector.load %arg4[%c0_4, %c0_5] : memref<147x64xbf16, #tpu.memory_space<vmem>>, vector<147x64xbf16>
    %cst = arith.constant dense<0.000000e+00> : vector<256x64xf32>
    %6 = tpu.matmul %4, %5, %cst {dimension_numbers = #tpu.dot_dimension_numbers<[1], [0], [0], [1], [0, 0, 1, 1], [], []>} : vector<256x147xbf16>, vector<147x64xbf16>, vector<256x64xf32> -> vector<256x64xf32>
    %7 = arith.addf %3, %6 : vector<256x64xf32>
    %c0_6 = arith.constant 0 : index
    %c0_7 = arith.constant 0 : index
    %8 = vector.load %arg7[%c0_6, %c0_7] : memref<256x64xf32, #tpu.memory_space<vmem>>, vector<256x64xf32>
    tpu.vector_store %arg7[%c0_6, %c0_7], %7 {strides = array<i32>} : memref<256x64xf32, #tpu.memory_space<vmem>>, vector<256x64xf32>,
    %c0_i32_8 = arith.constant 0 : i32
    %9 = arith.cmpi eq, %arg2, %c0_i32_8 : i32
    %10 = arith.extui %9 : i1 to i32
    %c0_i32_9 = arith.constant 0 : i32
    %11 = arith.cmpi ne, %10, %c0_i32_9 : i32
    scf.if %11 {
      %c0_10 = arith.constant 0 : index
      %c0_11 = arith.constant 0 : index
      %12 = vector.load %arg7[%c0_10, %c0_11] : memref<256x64xf32, #tpu.memory_space<vmem>>, vector<256x64xf32>
      %c0_12 = arith.constant 0 : index
      %c0_13 = arith.constant 0 : index
      %13 = vector.load %arg5[%c0_12, %c0_13] : memref<1x64xf32, #tpu.memory_space<vmem>>, vector<1x64xf32>
      %14 = vector.broadcast %13 : vector<1x64xf32> to vector<256x64xf32>
      %15 = arith.addf %12, %14 : vector<256x64xf32>
      %cst_14 = arith.constant 0.000000e+00 : f32
      %16 = vector.broadcast %cst_14 : f32 to vector<256x64xf32>
      %17 = arith.maximumf %15, %16 : vector<256x64xf32>
      %18 = arith.truncf %17 : vector<256x64xf32> to vector<256x64xbf16>
      %c0_15 = arith.constant 0 : index
      %c0_16 = arith.constant 0 : index
      %19 = vector.load %arg6[%c0_15, %c0_16] : memref<256x64xbf16, #tpu.memory_space<vmem>>, vector<256x64xbf16>
      tpu.vector_store %arg6[%c0_15, %c0_16], %18 {strides = array<i32>} : memref<256x64xbf16, #tpu.memory_space<vmem>>, vector<256x64xbf16>,
    } else {
    }
    return
  }
  func.func @transform_0(%arg0: i32, %arg1: i32, %arg2: i32) -> (i32, i32) {
    %c0_i32 = arith.constant 0 : i32
    return %arg0, %arg2 : i32, i32
  }
  func.func @transform_1(%arg0: i32, %arg1: i32, %arg2: i32) -> (i32, i32) {
    %c0_i32 = arith.constant 0 : i32
    return %arg2, %arg1 : i32, i32
  }
  func.func @transform_2(%arg0: i32, %arg1: i32, %arg2: i32) -> (i32, i32) {
    %c0_i32 = arith.constant 0 : i32
    %c0_i32_0 = arith.constant 0 : i32
    return %c0_i32, %arg1 : i32, i32
  }
  func.func @transform_3(%arg0: i32, %arg1: i32, %arg2: i32) -> (i32, i32) {
    %c0_i32 = arith.constant 0 : i32
    return %arg0, %arg1 : i32, i32
  }
}

</mosaic_0001>

<llo_original>
// kernel: conv_bn.1
$region0: #{conv_bn.1}
  #allocation0 [shape = 'u32[]', space=smem, size = 0x4, offset = 0x4, fixed_abs, tag = 'smem constant byte address 0x4 - core index']
  #allocation1 [shape = 'u32[144,128]{1,0:T(1,128)}', space=vmem, size = 0x12000, scoped, tag = 'internal scratch']
  #allocation2 [shape = 'f32[256,64]{1,0:T(8,128)}', space=vmem, size = 0x20000, scoped, tag = 'scratch operand']
  %s0 = inlined_call_operand.vmem [shape: bf16[2048,147], index: 0, kind: input, shape index: {}]
  %s1 = inlined_call_operand.vmem [shape: bf16[147,64], index: 1, kind: input, shape index: {}]
  %s2 = inlined_call_operand.vmem [shape: f32[1,64], index: 2, kind: input, shape index: {}]
  %s3 = inlined_call_operand.hbm [shape: bf16[2048,64], index: 3, kind: output, shape index: {}]
  %s4 = sld [smem:[#allocation0]]
  $region53: #{conv_bn.1} parent=0
    _
  %s6 = ssub.s32 1, %s4
  %s7 = scalar_select 0, %s6, %s4
  $region1: #{conv_bn.1} parent=0
    #allocation3 [shape = 'u8[131072]{0}', space=vmem, size = 0x20000, scoped, tag = 'output window, operand 0']
    #allocation4 [shape = 's32[2]{0}', space=sflag, size = 0x8, scoped, tag = 'scoped memory for conv_bn.1']
    %8 = vsyncpa [#allocation4], 0
    %s9 = scalar_lea.sflag [#allocation4], 1
    %10 = vsyncpa %s9, 0
    loop: start=0, step=1, limit=10
    $region2: #{conv_bn.1} parent=1 // loop_pre_header
      _
    $region3: #{conv_bn.1} parent=1 // loop_header
      %s12 = sphi 0, %s16
      %p13 = scmp.ge.s32.totalorder %s12, 10
      %s19 = sphi 0, %s38
      %s20 = sphi 0, %s34
      %s21 = sphi 0, %s30
      %s22 = sphi 0, %s19
      %s23 = sphi 0, %s20
      %s24 = sphi 0, %s21
      %s25 = sphi 0, %s22
      %s26 = sphi 0, %s23
      %s27 = sphi 0, %s24
      %s43 = sphi 0, %s45
      %s46 = sphi 0, %s43
      %s47 = sphi 0, %s46
      %s63 = sphi 0, %s47
      %s71 = sphi 0, %s73
      %s74 = sphi 0, %s71
      %s75 = sphi 0, %s74
      %s91 = sphi 0, %s75
      %s97 = sphi 0, %s99
      %s100 = sphi 0, %s97
      %s101 = sphi 0, %s100
      %s117 = sphi 0, %s101
      %s125 = sphi 0, %s127
      %s128 = sphi 0, %s125
      %s129 = sphi 0, %s128
      %s145 = sphi 0, %s129
    $region4: #{conv_bn.1} parent=1 // loop_header_branch
      %15 = sbr.rel (%p13) target = $region8
    $region5: #{conv_bn.1} parent=1 // loop_body
      %s17 = ssub.s32 %s12, 1
      %s18 = ssub.s32 %s12, 2
      %s28 = sadd.s32 1, %s21
      %p29 = scmp.ge.s32.totalorder %s28, 1
      %s30 = scalar_select %p29, 0, %s28
      %s31 = sadd.s32 1, %s20
      %s32 = scalar_select %p29, %s31, %s20
      %p33 = scmp.ge.s32.totalorder %s32, 1
      %s34 = scalar_select %p33, 0, %s32
      %s35 = sadd.s32 1, %s19
      %s36 = scalar_select %p33, %s35, %s19
      %p37 = scmp.ge.s32.totalorder %s36, 8
      %s38 = scalar_select %p37, 0, %s36
      %s39 = ssub.s32 %s19, %s38
      %s40 = ssub.s32 %s21, %s30
      %s41 = sor.u32 %s39, %s40
      %p42 = scmp.eq.s32.totalorder %s41, 0
      %s44 = sadd.s32 %s43, 1
      %s45 = scalar_select %p42, %s43, %s44
      %p48 = pneg %p42
      %p49 = scmp.eq.s32.totalorder %s12, 7
      %p50 = por %p48, %p49
      %p51 = scmp.ne.s32.totalorder %s43, %s46
      %p52 = scmp.eq.s32.totalorder %s12, 0
      %p53 = por %p51, %p52
      %p54 = scmp.ne.s32.totalorder %s43, %s46
      %p55 = scmp.eq.s32.totalorder %s17, 7
      %p56 = por %p54, %p55
      %p57 = scmp.ne.s32.totalorder %s46, %s47
      %p58 = scmp.eq.s32.totalorder %s17, 0
      %p59 = por %p57, %p58
      %p60 = scmp.ne.s32.totalorder %s46, %s47
      %p61 = scmp.eq.s32.totalorder %s18, 7
      %p62 = por %p60, %p61
      %p64 = scmp.ne.s32.totalorder %s47, %s63
      %p65 = scmp.eq.s32.totalorder %s18, 0
      %p66 = por %p64, %p65
      %s67 = ssub.s32 %s21, %s30
      %s68 = ssub.s32 %s20, %s34
      %s69 = sor.u32 %s67, %s68
      %p70 = scmp.eq.s32.totalorder %s69, 0
      %s72 = sadd.s32 %s71, 1
      %s73 = scalar_select %p70, %s71, %s72
      %p76 = pneg %p70
      %p77 = scmp.eq.s32.totalorder %s12, 7
      %p78 = por %p76, %p77
      %p79 = scmp.ne.s32.totalorder %s71, %s74
      %p80 = scmp.eq.s32.totalorder %s12, 0
      %p81 = por %p79, %p80
      %p82 = scmp.ne.s32.totalorder %s71, %s74
      %p83 = scmp.eq.s32.totalorder %s17, 7
      %p84 = por %p82, %p83
      %p85 = scmp.ne.s32.totalorder %s74, %s75
      %p86 = scmp.eq.s32.totalorder %s17, 0
      %p87 = por %p85, %p86
      %p88 = scmp.ne.s32.totalorder %s74, %s75
      %p89 = scmp.eq.s32.totalorder %s18, 7
      %p90 = por %p88, %p89
      %p92 = scmp.ne.s32.totalorder %s75, %s91
      %p93 = scmp.eq.s32.totalorder %s18, 0
      %p94 = por %p92, %p93
      %s95 = ssub.s32 %s20, %s34
      %p96 = scmp.eq.s32.totalorder %s95, 0
      %s98 = sadd.s32 %s97, 1
      %s99 = scalar_select %p96, %s97, %s98
      %p102 = pneg %p96
      %p103 = scmp.eq.s32.totalorder %s12, 7
      %p104 = por %p102, %p103
      %p105 = scmp.ne.s32.totalorder %s97, %s100
      %p106 = scmp.eq.s32.totalorder %s12, 0
      %p107 = por %p105, %p106
      %p108 = scmp.ne.s32.totalorder %s97, %s100
      %p109 = scmp.eq.s32.totalorder %s17, 7
      %p110 = por %p108, %p109
      %p111 = scmp.ne.s32.totalorder %s100, %s101
      %p112 = scmp.eq.s32.totalorder %s17, 0
      %p113 = por %p111, %p112
      %p114 = scmp.ne.s32.totalorder %s100, %s101
      %p115 = scmp.eq.s32.totalorder %s18, 7
      %p116 = por %p114, %p115
      %p118 = scmp.ne.s32.totalorder %s101, %s117
      %p119 = scmp.eq.s32.totalorder %s18, 0
      %p120 = por %p118, %p119
      %s121 = ssub.s32 %s19, %s38
      %s122 = ssub.s32 %s20, %s34
      %s123 = sor.u32 %s121, %s122
      %p124 = scmp.eq.s32.totalorder %s123, 0
      %s126 = sadd.s32 %s125, 1
      %s127 = scalar_select %p124, %s125, %s126
      %p130 = pneg %p124
      %p131 = scmp.eq.s32.totalorder %s12, 7
      %p132 = por %p130, %p131
      %p133 = scmp.ne.s32.totalorder %s125, %s128
      %p134 = scmp.eq.s32.totalorder %s12, 0
      %p135 = por %p133, %p134
      %p136 = scmp.ne.s32.totalorder %s125, %s128
      %p137 = scmp.eq.s32.totalorder %s17, 7
      %p138 = por %p136, %p137
      %p139 = scmp.ne.s32.totalorder %s128, %s129
      %p140 = scmp.eq.s32.totalorder %s17, 0
      %p141 = por %p139, %p140
      %p142 = scmp.ne.s32.totalorder %s128, %s129
      %p143 = scmp.eq.s32.totalorder %s18, 7
      %p144 = por %p142, %p143
      %p146 = scmp.ne.s32.totalorder %s129, %s145
      %p147 = scmp.eq.s32.totalorder %s18, 0
      %p148 = por %p146, %p147
      %p149 = scmp.le.s32.totalorder 1, %s12
      %p150 = scmp.lt.s32.totalorder %s12, 9
      %p151 = pnand %p149, %p150
      %p152 = pneg %p151
      // Predicated region
      $region9: #{conv_bn.1} parent=5 // pred_check
        _
      $region10: #{conv_bn.1} parent=5 // pred_check_branch
        %154 = sbr.rel (%p151) target = $region12
      $region11: #{conv_bn.1} parent=5 // pred_region
        %s155 = ssub.s32 %s12, 1
        // Predicated region
        $region13: #{conv_bn.1} parent=11 // pred_check
          %p156 = pneg %p87
        $region14: #{conv_bn.1} parent=11 // pred_check_branch
          %158 = sbr.rel (%p156) target = $region16
        $region15: #{conv_bn.1} parent=11 // pred_region
          %s159 = smul.u32 19, %s24
          %p160 = scmp.lt.s32.totalorder %s159, 18
          %s161 = scalar_select %p160, %s159, 18
          %p162 = scmp.lt.s32.totalorder %s23, 0
          %s163 = scalar_select %p162, %s23, 0
          %s164 = sadd.s32 %s163, %s161
          %s165 = smul.addr %s164, 4
          %s166 = scalar_lea.vmem %s1, %s165
          %s167 = smul.u32 19, %s24
        $region16: #{conv_bn.1} parent=11 // pred_fallthru
          _
        // Predicated region
        $region17: #{conv_bn.1} parent=11 // pred_check
          %p168 = pneg %p113
        $region18: #{conv_bn.1} parent=11 // pred_check_branch
          %170 = sbr.rel (%p168) target = $region20
        $region19: #{conv_bn.1} parent=11 // pred_region
          %p171 = scmp.lt.s32.totalorder %s23, 0
          %s172 = scalar_select %p171, %s23, 0
          %s173 = scalar_lea.vmem %s2, %s172
        $region20: #{conv_bn.1} parent=11 // pred_fallthru
          _
      $region12: #{conv_bn.1} parent=5 // pred_fallthru
        _
      %p174 = scmp.lt.s32.totalorder %s12, 8
      // Predicated region
      $region21: #{conv_bn.1} parent=5 // pred_check
        %p175 = pneg %p174
      $region22: #{conv_bn.1} parent=5 // pred_check_branch
        %177 = sbr.rel (%p175) target = $region24
      $region23: #{conv_bn.1} parent=5 // pred_region
        // Predicated region
        $region25: #{conv_bn.1} parent=23 // pred_check
          %p178 = pneg %p53
        $region26: #{conv_bn.1} parent=23 // pred_check_branch
          %180 = sbr.rel (%p178) target = $region28
        $region27: #{conv_bn.1} parent=23 // pred_region
          %s181 = smul.u32 32, %s19
          %s182 = smul.u32 2, %s21
          %p183 = scmp.lt.s32.totalorder %s181, 255
          %s184 = scalar_select %p183, %s181, 255
          %p185 = scmp.lt.s32.totalorder %s182, 1
          %s186 = scalar_select %p185, %s182, 1
          %s187 = smul.addr %s184, 2
          %s188 = sadd.s32 %s186, %s187
          %s189 = smul.addr %s188, 4
          %s190 = scalar_lea.vmem %s0, %s189
          %s191 = smul.u32 32, %s19
          %s192 = smul.u32 2, %s21
        $region28: #{conv_bn.1} parent=23 // pred_fallthru
          _
      $region24: #{conv_bn.1} parent=5 // pred_fallthru
        _
      %p193 = scmp.le.s32.totalorder 1, %s12
      %p194 = scmp.lt.s32.totalorder %s12, 9
      %p195 = pnand %p193, %p194
      %p196 = pneg %p195
      // Predicated region
      $region29: #{conv_bn.1} parent=5 // pred_check
        _
      $region30: #{conv_bn.1} parent=5 // pred_check_branch
        %198 = sbr.rel (%p195) target = $region32
      $region31: #{conv_bn.1} parent=5 // pred_region
        %s199 = ssub.s32 %s12, 1
        %s200 = smul.u32 32, %s22
        %s201 = smul.u32 2, %s24
        %p202 = scmp.lt.s32.totalorder %s200, 255
        %s203 = scalar_select %p202, %s200, 255
        %p204 = scmp.lt.s32.totalorder %s201, 1
        %s205 = scalar_select %p204, %s201, 1
        %s206 = smul.addr %s203, 2
        %s207 = sadd.s32 %s205, %s206
        %s208 = smul.addr %s207, 4
        %s209 = scalar_lea.vmem %s0, %s208
        %p210 = pneg %p59
        %p211 = pneg %p56
        %s212 = smul.u32 19, %s24
        %p213 = scmp.lt.s32.totalorder %s212, 18
        %s214 = scalar_select %p213, %s212, 18
        %p215 = scmp.lt.s32.totalorder %s23, 0
        %s216 = scalar_select %p215, %s23, 0
        %s217 = sadd.s32 %s216, %s214
        %s218 = smul.addr %s217, 4
        %s219 = scalar_lea.vmem %s1, %s218
        %p220 = pneg %p87
        %p221 = pneg %p84
        %p222 = scmp.lt.s32.totalorder %s23, 0
        %s223 = scalar_select %p222, %s23, 0
        %s224 = scalar_lea.vmem %s2, %s223
        %p225 = pneg %p113
        %p226 = pneg %p110
        %p227 = pneg %p141
        %p228 = pneg %p138
        %s229 = sand.u32 %s128, 1
        %s230 = scalar_lea.sflag [#allocation4], %s229
        %s231 = sand.u32 %s128, 1
        %s232 = smul.addr %s231, 128
        %s233 = scalar_lea.vmem [#allocation3], %s232
        %s234 = smul.u32 32, %s22
        %s235 = smul.u32 2, %s24
        %p236 = scmp.lt.s32.totalorder %s234, 255
        %s237 = scalar_select %p236, %s234, 255
        %p238 = scmp.lt.s32.totalorder %s235, 1
        %s239 = scalar_select %p238, %s235, 1
        %s240 = smul.addr %s237, 2
        %s241 = sadd.s32 %s239, %s240
        %s242 = smul.addr %s241, 4
        %s243 = scalar_lea.vmem %s0, %s242
        %s244 = smul.u32 32, %s22
        %s245 = smul.u32 2, %s24
        %s246 = smul.u32 19, %s24
        %p247 = scmp.lt.s32.totalorder %s246, 18
        %s248 = scalar_select %p247, %s246, 18
        %p249 = scmp.lt.s32.totalorder %s23, 0
        %s250 = scalar_select %p249, %s23, 0
        %s251 = sadd.s32 %s250, %s248
        %s252 = smul.addr %s251, 4
        %s253 = scalar_lea.vmem %s1, %s252
        %s254 = smul.u32 19, %s24
        %p255 = scmp.lt.s32.totalorder %s23, 0
        %s256 = scalar_select %p255, %s23, 0
        %s257 = scalar_lea.vmem %s2, %s256
        %s258 = smul.u32 32, %s22
        %p260 = scmp.eq.s32.totalorder %s24, 0
        // Predicated region
        $region33: #{conv_bn.1} parent=31 // pred_check
          %p261 = pneg %p260
        $region34: #{conv_bn.1} parent=31 // pred_check_branch
          %263 = sbr.rel (%p261) target = $region36
        $region35: #{conv_bn.1} parent=31 // pred_region
          %vm264 = vcmask 523264
          %265 = vst.msk [vmem:[#allocation2] sm:$0xff] %vm264, 0.0
          %266 = vst.msk [vmem:[#allocation2 + $0x8] sm:$0xff] %vm264, 0.0
          %267 = vst.msk [vmem:[#allocation2 + $0x10] sm:$0xff] %vm264, 0.0
          %268 = vst.msk [vmem:[#allocation2 + $0x18] sm:$0xff] %vm264, 0.0
          %269 = vst.msk [vmem:[#allocation2 + $0x20] sm:$0xff] %vm264, 0.0
          %270 = vst.msk [vmem:[#allocation2 + $0x28] sm:$0xff] %vm264, 0.0
          %271 = vst.msk [vmem:[#allocation2 + $0x30] sm:$0xff] %vm264, 0.0
          %272 = vst.msk [vmem:[#allocation2 + $0x38] sm:$0xff] %vm264, 0.0
          %273 = vst.msk [vmem:[#allocation2 + $0x40] sm:$0xff] %vm264, 0.0
          %274 = vst.msk [vmem:[#allocation2 + $0x48] sm:$0xff] %vm264, 0.0
          %275 = vst.msk [vmem:[#allocation2 + $0x50] sm:$0xff] %vm264, 0.0
          %276 = vst.msk [vmem:[#allocation2 + $0x58] sm:$0xff] %vm264, 0.0
          %277 = vst.msk [vmem:[#allocation2 + $0x60] sm:$0xff] %vm264, 0.0
          %278 = vst.msk [vmem:[#allocation2 + $0x68] sm:$0xff] %vm264, 0.0
          %279 = vst.msk [vmem:[#allocation2 + $0x70] sm:$0xff] %vm264, 0.0
          %280 = vst.msk [vmem:[#allocation2 + $0x78] sm:$0xff] %vm264, 0.0
          %281 = vst.msk [vmem:[#allocation2 + $0x80] sm:$0xff] %vm264, 0.0
          %282 = vst.msk [vmem:[#allocation2 + $0x88] sm:$0xff] %vm264, 0.0
          %283 = vst.msk [vmem:[#allocation2 + $0x90] sm:$0xff] %vm264, 0.0
          %284 = vst.msk [vmem:[#allocation2 + $0x98] sm:$0xff] %vm264, 0.0
          %285 = vst.msk [vmem:[#allocation2 + $0xa0] sm:$0xff] %vm264, 0.0
          %286 = vst.msk [vmem:[#allocation2 + $0xa8] sm:$0xff] %vm264, 0.0
          %287 = vst.msk [vmem:[#allocation2 + $0xb0] sm:$0xff] %vm264, 0.0
          %288 = vst.msk [vmem:[#allocation2 + $0xb8] sm:$0xff] %vm264, 0.0
          %289 = vst.msk [vmem:[#allocation2 + $0xc0] sm:$0xff] %vm264, 0.0
          %290 = vst.msk [vmem:[#allocation2 + $0xc8] sm:$0xff] %vm264, 0.0
          %291 = vst.msk [vmem:[#allocation2 + $0xd0] sm:$0xff] %vm264, 0.0
          %292 = vst.msk [vmem:[#allocation2 + $0xd8] sm:$0xff] %vm264, 0.0
          %293 = vst.msk [vmem:[#allocation2 + $0xe0] sm:$0xff] %vm264, 0.0
          %294 = vst.msk [vmem:[#allocation2 + $0xe8] sm:$0xff] %vm264, 0.0
          %295 = vst.msk [vmem:[#allocation2 + $0xf0] sm:$0xff] %vm264, 0.0
          %296 = vst.msk [vmem:[#allocation2 + $0xf8] sm:$0xff] %vm264, 0.0
        $region36: #{conv_bn.1} parent=31 // pred_fallthru
          _
        %v297 = vld [vmem:[#allocation2] sm:$0xff]
        %v298 = vld [vmem:[#allocation2 + $0x8] sm:$0xff]
        %v299 = vld [vmem:[#allocation2 + $0x10] sm:$0xff]
        %v300 = vld [vmem:[#allocation2 + $0x18] sm:$0xff]
        %v301 = vld [vmem:[#allocation2 + $0x20] sm:$0xff]
        %v302 = vld [vmem:[#allocation2 + $0x28] sm:$0xff]
        %v303 = vld [vmem:[#allocation2 + $0x30] sm:$0xff]
        %v304 = vld [vmem:[#allocation2 + $0x38] sm:$0xff]
        %v305 = vld [vmem:[#allocation2 + $0x40] sm:$0xff]
        %v306 = vld [vmem:[#allocation2 + $0x48] sm:$0xff]
        %v307 = vld [vmem:[#allocation2 + $0x50] sm:$0xff]
        %v308 = vld [vmem:[#allocation2 + $0x58] sm:$0xff]
        %v309 = vld [vmem:[#allocation2 + $0x60] sm:$0xff]
        %v310 = vld [vmem:[#allocation2 + $0x68] sm:$0xff]
        %v311 = vld [vmem:[#allocation2 + $0x70] sm:$0xff]
        %v312 = vld [vmem:[#allocation2 + $0x78] sm:$0xff]
        %v313 = vld [vmem:[#allocation2 + $0x80] sm:$0xff]
        %v314 = vld [vmem:[#allocation2 + $0x88] sm:$0xff]
        %v315 = vld [vmem:[#allocation2 + $0x90] sm:$0xff]
        %v316 = vld [vmem:[#allocation2 + $0x98] sm:$0xff]
        %v317 = vld [vmem:[#allocation2 + $0xa0] sm:$0xff]
        %v318 = vld [vmem:[#allocation2 + $0xa8] sm:$0xff]
        %v319 = vld [vmem:[#allocation2 + $0xb0] sm:$0xff]
        %v320 = vld [vmem:[#allocation2 + $0xb8] sm:$0xff]
        %v321 = vld [vmem:[#allocation2 + $0xc0] sm:$0xff]
        %v322 = vld [vmem:[#allocation2 + $0xc8] sm:$0xff]
        %v323 = vld [vmem:[#allocation2 + $0xd0] sm:$0xff]
        %v324 = vld [vmem:[#allocation2 + $0xd8] sm:$0xff]
        %v325 = vld [vmem:[#allocation2 + $0xe0] sm:$0xff]
        %v326 = vld [vmem:[#allocation2 + $0xe8] sm:$0xff]
        %v327 = vld [vmem:[#allocation2 + $0xf0] sm:$0xff]
        %v328 = vld [vmem:[#allocation2 + $0xf8] sm:$0xff]
        %v329 = vld [vmem:[%s243] sm:$0xff]
        %v330 = vld [vmem:[%s243 + $0x8] sm:$0xff]
        %v331 = vld [vmem:[%s243 + $0x10] sm:$0xff]
        %v332 = vld [vmem:[%s243 + $0x18] sm:$0xff]
        %v333 = vld [vmem:[%s243 + $0x20] sm:$0xff]
        %v334 = vld [vmem:[%s243 + $0x28] sm:$0xff]
        %v335 = vld [vmem:[%s243 + $0x30] sm:$0xff]
        %v336 = vld [vmem:[%s243 + $0x38] sm:$0xff]
        %v337 = vld [vmem:[%s243 + $0x40] sm:$0xff]
        %v338 = vld [vmem:[%s243 + $0x48] sm:$0xff]
        %v339 = vld [vmem:[%s243 + $0x50] sm:$0xff]
        %v340 = vld [vmem:[%s243 + $0x58] sm:$0xff]
        %v341 = vld [vmem:[%s243 + $0x60] sm:$0xff]
        %v342 = vld [vmem:[%s243 + $0x68] sm:$0xff]
        %v343 = vld [vmem:[%s243 + $0x70] sm:$0xff]
        %v344 = vld [vmem:[%s243 + $0x78] sm:$0xff]
        %v345 = vld [vmem:[%s243 + $0x80] sm:$0xff]
        %v346 = vld [vmem:[%s243 + $0x88] sm:$0xff]
        %v347 = vld [vmem:[%s243 + $0x90] sm:$0xff]
        %v348 = vld [vmem:[%s243 + $0x98] sm:$0xff]
        %v349 = vld [vmem:[%s243 + $0xa0] sm:$0xff]
        %v350 = vld [vmem:[%s243 + $0xa8] sm:$0xff]
        %v351 = vld [vmem:[%s243 + $0xb0] sm:$0xff]
        %v352 = vld [vmem:[%s243 + $0xb8] sm:$0xff]
        %v353 = vld [vmem:[%s243 + $0xc0] sm:$0xff]
        %v354 = vld [vmem:[%s243 + $0xc8] sm:$0xff]
        %v355 = vld [vmem:[%s243 + $0xd0] sm:$0xff]
        %v356 = vld [vmem:[%s243 + $0xd8] sm:$0xff]
        %v357 = vld [vmem:[%s243 + $0xe0] sm:$0xff]
        %v358 = vld [vmem:[%s243 + $0xe8] sm:$0xff]
        %v359 = vld [vmem:[%s243 + $0xf0] sm:$0xff]
        %v360 = vld [vmem:[%s243 + $0xf8] sm:$0xff]
        %v361 = vld [vmem:[%s253] sm:$0xf]
        %v362 = vld [vmem:[%s253 + $0x4] sm:$0xf]
        %v363 = vld [vmem:[%s253 + $0x8] sm:$0xf]
        %v364 = vld [vmem:[%s253 + $0xc] sm:$0xf]
        %v365 = vld [vmem:[%s253 + $0x10] sm:$0xf]
        %v366 = vld [vmem:[%s253 + $0x14] sm:$0xf]
        %v367 = vld [vmem:[%s253 + $0x18] sm:$0xf]
        %v368 = vld [vmem:[%s253 + $0x1c] sm:$0xf]
        %v369 = vld [vmem:[%s253 + $0x20] sm:$0xf]
        %v370 = vld [vmem:[%s253 + $0x24] sm:$0xf]
        %v371 = vld [vmem:[%s253 + $0x28] sm:$0xf]
        %v372 = vld [vmem:[%s253 + $0x2c] sm:$0xf]
        %v373 = vld [vmem:[%s253 + $0x30] sm:$0xf]
        %v374 = vld [vmem:[%s253 + $0x34] sm:$0xf]
        %v375 = vld [vmem:[%s253 + $0x38] sm:$0xf]
        %v376 = vld [vmem:[%s253 + $0x3c] sm:$0xf]
        %v377 = vld [vmem:[%s253 + $0x40] sm:$0xf]
        %v378 = vld [vmem:[%s253 + $0x44] sm:$0xf]
        %v379 = vld [vmem:[%s253 + $0x48] sm:$0x3]
        %v412 = vunpack.c.l.b16 %v329
        %v413 = vunpack.c.h.b16 %v329
        %v414 = vunpack.c.l.b16 %v330
        %v415 = vunpack.c.h.b16 %v330
        %v416 = vunpack.c.l.b16 %v331
        %v417 = vunpack.c.h.b16 %v331
        %v418 = vunpack.c.l.b16 %v332
        %v419 = vunpack.c.h.b16 %v332
        %v420 = vunpack.c.l.b16 %v333
        %v421 = vunpack.c.h.b16 %v333
        %v422 = vunpack.c.l.b16 %v334
        %v423 = vunpack.c.h.b16 %v334
        %v424 = vunpack.c.l.b16 %v335
        %v425 = vunpack.c.h.b16 %v335
        %v426 = vunpack.c.l.b16 %v336
        %v427 = vunpack.c.h.b16 %v336
        %v428 = vunpack.c.l.b16 %v337
        %v429 = vunpack.c.h.b16 %v337
        %v430 = vunpack.c.l.b16 %v338
        %v431 = vunpack.c.h.b16 %v338
        %v432 = vunpack.c.l.b16 %v339
        %v433 = vunpack.c.h.b16 %v339
        %v434 = vunpack.c.l.b16 %v340
        %v435 = vunpack.c.h.b16 %v340
        %v436 = vunpack.c.l.b16 %v341
        %v437 = vunpack.c.h.b16 %v341
        %v438 = vunpack.c.l.b16 %v342
        %v439 = vunpack.c.h.b16 %v342
        %v440 = vunpack.c.l.b16 %v343
        %v441 = vunpack.c.h.b16 %v343
        %v442 = vunpack.c.l.b16 %v344
        %v443 = vunpack.c.h.b16 %v344
        %v444 = vunpack.c.l.b16 %v345
        %v445 = vunpack.c.h.b16 %v345
        %v446 = vunpack.c.l.b16 %v346
        %v447 = vunpack.c.h.b16 %v346
        %v448 = vunpack.c.l.b16 %v347
        %v449 = vunpack.c.h.b16 %v347
        %v450 = vunpack.c.l.b16 %v348
        %v451 = vunpack.c.h.b16 %v348
        %v452 = vunpack.c.l.b16 %v349
        %v453 = vunpack.c.h.b16 %v349
        %v454 = vunpack.c.l.b16 %v350
        %v455 = vunpack.c.h.b16 %v350
        %v456 = vunpack.c.l.b16 %v351
        %v457 = vunpack.c.h.b16 %v351
        %v458 = vunpack.c.l.b16 %v352
        %v459 = vunpack.c.h.b16 %v352
        %v460 = vunpack.c.l.b16 %v353
        %v461 = vunpack.c.h.b16 %v353
        %v462 = vunpack.c.l.b16 %v354
        %v463 = vunpack.c.h.b16 %v354
        %v464 = vunpack.c.l.b16 %v355
        %v465 = vunpack.c.h.b16 %v355
        %v466 = vunpack.c.l.b16 %v356
        %v467 = vunpack.c.h.b16 %v356
        %v468 = vunpack.c.l.b16 %v357
        %v469 = vunpack.c.h.b16 %v357
        %v470 = vunpack.c.l.b16 %v358
        %v471 = vunpack.c.h.b16 %v358
        %v472 = vunpack.c.l.b16 %v359
        %v473 = vunpack.c.h.b16 %v359
        %v474 = vunpack.c.l.b16 %v360
        %v475 = vunpack.c.h.b16 %v360
        %v476 = vpack.c.b16 %v414, %v412
        %v477 = vpack.c.b16 %v415, %v413
        %v478 = vpack.c.b16 %v418, %v416
        %v479 = vpack.c.b16 %v419, %v417
        %v480 = vpack.c.b16 %v422, %v420
        %v481 = vpack.c.b16 %v423, %v421
        %v482 = vpack.c.b16 %v426, %v424
        %v483 = vpack.c.b16 %v427, %v425
        %v484 = vpack.c.b16 %v430, %v428
        %v485 = vpack.c.b16 %v431, %v429
        %v486 = vpack.c.b16 %v434, %v432
        %v487 = vpack.c.b16 %v435, %v433
        %v488 = vpack.c.b16 %v438, %v436
        %v489 = vpack.c.b16 %v439, %v437
        %v490 = vpack.c.b16 %v442, %v440
        %v491 = vpack.c.b16 %v443, %v441
        %v492 = vpack.c.b16 %v446, %v444
        %v493 = vpack.c.b16 %v447, %v445
        %v494 = vpack.c.b16 %v450, %v448
        %v495 = vpack.c.b16 %v451, %v449
        %v496 = vpack.c.b16 %v454, %v452
        %v497 = vpack.c.b16 %v455, %v453
        %v498 = vpack.c.b16 %v458, %v456
        %v499 = vpack.c.b16 %v459, %v457
        %v500 = vpack.c.b16 %v462, %v460
        %v501 = vpack.c.b16 %v463, %v461
        %v502 = vpack.c.b16 %v466, %v464
        %v503 = vpack.c.b16 %v467, %v465
        %v504 = vpack.c.b16 %v470, %v468
        %v505 = vpack.c.b16 %v471, %v469
        %v506 = vpack.c.b16 %v474, %v472
        %v507 = vpack.c.b16 %v475, %v473
        %v543 = vunpack.c.l.b16 %v361
        %v544 = vunpack.c.l.b16 %v362
        %v545 = vunpack.c.l.b16 %v363
        %v546 = vunpack.c.l.b16 %v364
        %v547 = vunpack.c.l.b16 %v365
        %v548 = vunpack.c.l.b16 %v366
        %v549 = vunpack.c.l.b16 %v367
        %v550 = vunpack.c.l.b16 %v368
        %v551 = vunpack.c.l.b16 %v369
        %v552 = vunpack.c.l.b16 %v370
        %v553 = vunpack.c.l.b16 %v371
        %v554 = vunpack.c.l.b16 %v372
        %v555 = vunpack.c.l.b16 %v373
        %v556 = vunpack.c.l.b16 %v374
        %v557 = vunpack.c.l.b16 %v375
        %v558 = vunpack.c.l.b16 %v376
        %v559 = vunpack.c.l.b16 %v377
        %v560 = vunpack.c.l.b16 %v378
        %v561 = vunpack.c.l.b16 %v379
        %v562 = vpack.c.b16 %v544, %v543
        %v563 = vpack.c.b16 %v546, %v545
        %v564 = vpack.c.b16 %v548, %v547
        %v565 = vpack.c.b16 %v550, %v549
        %v566 = vpack.c.b16 %v552, %v551
        %v567 = vpack.c.b16 %v554, %v553
        %v568 = vpack.c.b16 %v556, %v555
        %v569 = vpack.c.b16 %v558, %v557
        %v570 = vpack.c.b16 %v560, %v559
        %v571 = vpack.c.b16 %v561, %v561
        %vm581 = vcmask 154624
        %v583 = vsel %vm581, %v477, 0
        %v586 = vsel %vm581, %v479, 0
        %v589 = vsel %vm581, %v481, 0
        %v592 = vsel %vm581, %v483, 0
        %v595 = vsel %vm581, %v485, 0
        %v598 = vsel %vm581, %v487, 0
        %v601 = vsel %vm581, %v489, 0
        %v604 = vsel %vm581, %v491, 0
        %v607 = vsel %vm581, %v493, 0
        %v610 = vsel %vm581, %v495, 0
        %v613 = vsel %vm581, %v497, 0
        %v616 = vsel %vm581, %v499, 0
        %v619 = vsel %vm581, %v501, 0
        %v622 = vsel %vm581, %v503, 0
        %v625 = vsel %vm581, %v505, 0
        %v628 = vsel %vm581, %v507, 0
        %vm630 = vcmask 1040384
        %vm631 = vcmask 1041408
        %v632 = vsel %vm630, 4294967295, 65535
        %v633 = vsel %vm631, %v632, 0
        %v635 = vand.u32 %v571, %v633
        %637 = vmatprep.subr.bf16.mxu0 0
        %638 = vmatpush1.bf16.msra.mxu0 %v562
        %639 = vmatprep.subr.bf16.mxu0 0
        %640 = vmatpush1.bf16.msra.mxu0 %v563
        %641 = vmatprep.subr.bf16.mxu0 0
        %642 = vmatpush1.bf16.msra.mxu0 %v564
        %643 = vmatprep.subr.bf16.mxu0 0
        %644 = vmatpush1.bf16.msra.mxu0 %v565
        %645 = vmatprep.subr.bf16.mxu0 0
        %646 = vmatpush1.bf16.msra.mxu0 %v566
        %647 = vmatprep.subr.bf16.mxu0 0
        %648 = vmatpush1.bf16.msra.mxu0 %v567
        %649 = vmatprep.subr.bf16.mxu0 0
        %650 = vmatpush1.bf16.msra.mxu0 %v568
        %651 = vmatprep.subr.bf16.mxu0 0
        %652 = vmatpush1.bf16.msra.mxu0 %v569
        %653 = vmatprep.subr.bf16.mxu0 0
        %654 = vmatpush1.bf16.msra.mxu0 %v570
        %655 = vmatprep.subr.bf16.mxu0 0
        %656 = vmatpush1.bf16.msra.mxu0 %v635
        %657 = vmatprep.subr.bf16.mxu0 0
        %658 = vmatpush1.bf16.msra.mxu0 0
        %659 = vmatprep.subr.bf16.mxu0 0
        %660 = vmatpush1.bf16.msra.mxu0 0
        %661 = vmatprep.subr.bf16.mxu0 0
        %662 = vmatpush1.bf16.msra.mxu0 0
        %663 = vmatprep.subr.bf16.mxu0 0
        %664 = vmatpush1.bf16.msra.mxu0 0
        %665 = vmatprep.subr.bf16.mxu0 0
        %666 = vmatpush1.bf16.msra.mxu0 0
        %667 = vmatprep.subr.bf16.mxu0 0
        %668 = vmatpush1.bf16.msra.mxu0 0
        %669 = vmatprep.mubr.bf16.mxu0 %v583
        %670 = vmatmul.mubr.bf16.gmra.mrb[0].mxu0 %v476
        %v671 = vpop.f32.mrb[0].mxu0
        %v672 = vadd.f32 0.0, %v671
        %v673 = vpop.f32.mrb[0].mxu0
        %v674 = vpop.f32.mrb[0].mxu0
        %v675 = vadd.f32 0.0, %v674
        %v676 = vpop.f32.mrb[0].mxu0
        %677 = vmatprep.mubr.bf16.mxu0 %v586
        %678 = vmatmul.mubr.bf16.gmra.mrb[0].mxu0 %v478
        %v679 = vpop.f32.mrb[0].mxu0
        %v680 = vadd.f32 0.0, %v679
        %v681 = vpop.f32.mrb[0].mxu0
        %v682 = vpop.f32.mrb[0].mxu0
        %v683 = vadd.f32 0.0, %v682
        %v684 = vpop.f32.mrb[0].mxu0
        %685 = vmatprep.mubr.bf16.mxu0 %v589
        %686 = vmatmul.mubr.bf16.gmra.mrb[0].mxu0 %v480
        %v687 = vpop.f32.mrb[0].mxu0
        %v688 = vadd.f32 0.0, %v687
        %v689 = vpop.f32.mrb[0].mxu0
        %v690 = vpop.f32.mrb[0].mxu0
        %v691 = vadd.f32 0.0, %v690
        %v692 = vpop.f32.mrb[0].mxu0
        %693 = vmatprep.mubr.bf16.mxu0 %v592
        %694 = vmatmul.mubr.bf16.gmra.mrb[0].mxu0 %v482
        %v695 = vpop.f32.mrb[0].mxu0
        %v696 = vadd.f32 0.0, %v695
        %v697 = vpop.f32.mrb[0].mxu0
        %v698 = vpop.f32.mrb[0].mxu0
        %v699 = vadd.f32 0.0, %v698
        %v700 = vpop.f32.mrb[0].mxu0
        %701 = vmatprep.mubr.bf16.mxu0 %v595
        %702 = vmatmul.mubr.bf16.gmra.mrb[0].mxu0 %v484
        %v703 = vpop.f32.mrb[0].mxu0
        %v704 = vadd.f32 0.0, %v703
        %v705 = vpop.f32.mrb[0].mxu0
        %v706 = vpop.f32.mrb[0].mxu0
        %v707 = vadd.f32 0.0, %v706
        %v708 = vpop.f32.mrb[0].mxu0
        %709 = vmatprep.mubr.bf16.mxu0 %v598
        %710 = vmatmul.mubr.bf16.gmra.mrb[0].mxu0 %v486
        %v711 = vpop.f32.mrb[0].mxu0
        %v712 = vadd.f32 0.0, %v711
        %v713 = vpop.f32.mrb[0].mxu0
        %v714 = vpop.f32.mrb[0].mxu0
        %v715 = vadd.f32 0.0, %v714
        %v716 = vpop.f32.mrb[0].mxu0
        %717 = vmatprep.mubr.bf16.mxu0 %v601
        %718 = vmatmul.mubr.bf16.gmra.mrb[0].mxu0 %v488
        %v719 = vpop.f32.mrb[0].mxu0
        %v720 = vadd.f32 0.0, %v719
        %v721 = vpop.f32.mrb[0].mxu0
        %v722 = vpop.f32.mrb[0].mxu0
        %v723 = vadd.f32 0.0, %v722
        %v724 = vpop.f32.mrb[0].mxu0
        %725 = vmatprep.mubr.bf16.mxu0 %v604
        %726 = vmatmul.mubr.bf16.gmra.mrb[0].mxu0 %v490
        %v727 = vpop.f32.mrb[0].mxu0
        %v728 = vadd.f32 0.0, %v727
        %v729 = vpop.f32.mrb[0].mxu0
        %v730 = vpop.f32.mrb[0].mxu0
        %v731 = vadd.f32 0.0, %v730
        %v732 = vpop.f32.mrb[0].mxu0
        %733 = vmatprep.mubr.bf16.mxu0 %v607
        %734 = vmatmul.mubr.bf16.gmra.mrb[0].mxu0 %v492
        %v735 = vpop.f32.mrb[0].mxu0
        %v736 = vadd.f32 0.0, %v735
        %v737 = vpop.f32.mrb[0].mxu0
        %v738 = vpop.f32.mrb[0].mxu0
        %v739 = vadd.f32 0.0, %v738
        %v740 = vpop.f32.mrb[0].mxu0
        %741 = vmatprep.mubr.bf16.mxu0 %v610
        %742 = vmatmul.mubr.bf16.gmra.mrb[0].mxu0 %v494
        %v743 = vpop.f32.mrb[0].mxu0
        %v744 = vadd.f32 0.0, %v743
        %v745 = vpop.f32.mrb[0].mxu0
        %v746 = vpop.f32.mrb[0].mxu0
        %v747 = vadd.f32 0.0, %v746
        %v748 = vpop.f32.mrb[0].mxu0
        %749 = vmatprep.mubr.bf16.mxu0 %v613
        %750 = vmatmul.mubr.bf16.gmra.mrb[0].mxu0 %v496
        %v751 = vpop.f32.mrb[0].mxu0
        %v752 = vadd.f32 0.0, %v751
        %v753 = vpop.f32.mrb[0].mxu0
        %v754 = vpop.f32.mrb[0].mxu0
        %v755 = vadd.f32 0.0, %v754
        %v756 = vpop.f32.mrb[0].mxu0
        %757 = vmatprep.mubr.bf16.mxu0 %v616
        %758 = vmatmul.mubr.bf16.gmra.mrb[0].mxu0 %v498
        %v759 = vpop.f32.mrb[0].mxu0
        %v760 = vadd.f32 0.0, %v759
        %v761 = vpop.f32.mrb[0].mxu0
        %v762 = vpop.f32.mrb[0].mxu0
        %v763 = vadd.f32 0.0, %v762
        %v764 = vpop.f32.mrb[0].mxu0
        %765 = vmatprep.mubr.bf16.mxu0 %v619
        %766 = vmatmul.mubr.bf16.gmra.mrb[0].mxu0 %v500
        %v767 = vpop.f32.mrb[0].mxu0
        %v768 = vadd.f32 0.0, %v767
        %v769 = vpop.f32.mrb[0].mxu0
        %v770 = vpop.f32.mrb[0].mxu0
        %v771 = vadd.f32 0.0, %v770
        %v772 = vpop.f32.mrb[0].mxu0
        %773 = vmatprep.mubr.bf16.mxu0 %v622
        %774 = vmatmul.mubr.bf16.gmra.mrb[0].mxu0 %v502
        %v775 = vpop.f32.mrb[0].mxu0
        %v776 = vadd.f32 0.0, %v775
        %v777 = vpop.f32.mrb[0].mxu0
        %v778 = vpop.f32.mrb[0].mxu0
        %v779 = vadd.f32 0.0, %v778
        %v780 = vpop.f32.mrb[0].mxu0
        %781 = vmatprep.mubr.bf16.mxu0 %v625
        %782 = vmatmul.mubr.bf16.gmra.mrb[0].mxu0 %v504
        %v783 = vpop.f32.mrb[0].mxu0
        %v784 = vadd.f32 0.0, %v783
        %v785 = vpop.f32.mrb[0].mxu0
        %v786 = vpop.f32.mrb[0].mxu0
        %v787 = vadd.f32 0.0, %v786
        %v788 = vpop.f32.mrb[0].mxu0
        %789 = vmatprep.mubr.bf16.mxu0 %v628
        %790 = vmatmul.mubr.bf16.gmra.mrb[0].mxu0 %v506
        %v791 = vpop.f32.mrb[0].mxu0
        %v792 = vadd.f32 0.0, %v791
        %v793 = vpop.f32.mrb[0].mxu0
        %v794 = vpop.f32.mrb[0].mxu0
        %v795 = vadd.f32 0.0, %v794
        %v796 = vpop.f32.mrb[0].mxu0
        %797 = vdwg.mxu0
        %v798 = vadd.f32 %v297, %v672
        %v799 = vadd.f32 %v298, %v675
        %v800 = vadd.f32 %v299, %v680
        %v801 = vadd.f32 %v300, %v683
        %v802 = vadd.f32 %v301, %v688
        %v803 = vadd.f32 %v302, %v691
        %v804 = vadd.f32 %v303, %v696
        %v805 = vadd.f32 %v304, %v699
        %v806 = vadd.f32 %v305, %v704
        %v807 = vadd.f32 %v306, %v707
        %v808 = vadd.f32 %v307, %v712
        %v809 = vadd.f32 %v308, %v715
        %v810 = vadd.f32 %v309, %v720
        %v811 = vadd.f32 %v310, %v723
        %v812 = vadd.f32 %v311, %v728
        %v813 = vadd.f32 %v312, %v731
        %v814 = vadd.f32 %v313, %v736
        %v815 = vadd.f32 %v314, %v739
        %v816 = vadd.f32 %v315, %v744
        %v817 = vadd.f32 %v316, %v747
        %v818 = vadd.f32 %v317, %v752
        %v819 = vadd.f32 %v318, %v755
        %v820 = vadd.f32 %v319, %v760
        %v821 = vadd.f32 %v320, %v763
        %v822 = vadd.f32 %v321, %v768
        %v823 = vadd.f32 %v322, %v771
        %v824 = vadd.f32 %v323, %v776
        %v825 = vadd.f32 %v324, %v779
        %v826 = vadd.f32 %v325, %v784
        %v827 = vadd.f32 %v326, %v787
        %v828 = vadd.f32 %v327, %v792
        %v829 = vadd.f32 %v328, %v795
        %vm830 = vcmask 523264
        %831 = vst.msk [vmem:[#allocation2] sm:$0xff] %vm830, %v798
        %832 = vst.msk [vmem:[#allocation2 + $0x8] sm:$0xff] %vm830, %v799
        %833 = vst.msk [vmem:[#allocation2 + $0x10] sm:$0xff] %vm830, %v800
        %834 = vst.msk [vmem:[#allocation2 + $0x18] sm:$0xff] %vm830, %v801
        %835 = vst.msk [vmem:[#allocation2 + $0x20] sm:$0xff] %vm830, %v802
        %836 = vst.msk [vmem:[#allocation2 + $0x28] sm:$0xff] %vm830, %v803
        %837 = vst.msk [vmem:[#allocation2 + $0x30] sm:$0xff] %vm830, %v804
        %838 = vst.msk [vmem:[#allocation2 + $0x38] sm:$0xff] %vm830, %v805
        %839 = vst.msk [vmem:[#allocation2 + $0x40] sm:$0xff] %vm830, %v806
        %840 = vst.msk [vmem:[#allocation2 + $0x48] sm:$0xff] %vm830, %v807
        %841 = vst.msk [vmem:[#allocation2 + $0x50] sm:$0xff] %vm830, %v808
        %842 = vst.msk [vmem:[#allocation2 + $0x58] sm:$0xff] %vm830, %v809
        %843 = vst.msk [vmem:[#allocation2 + $0x60] sm:$0xff] %vm830, %v810
        %844 = vst.msk [vmem:[#allocation2 + $0x68] sm:$0xff] %vm830, %v811
        %845 = vst.msk [vmem:[#allocation2 + $0x70] sm:$0xff] %vm830, %v812
        %846 = vst.msk [vmem:[#allocation2 + $0x78] sm:$0xff] %vm830, %v813
        %847 = vst.msk [vmem:[#allocation2 + $0x80] sm:$0xff] %vm830, %v814
        %848 = vst.msk [vmem:[#allocation2 + $0x88] sm:$0xff] %vm830, %v815
        %849 = vst.msk [vmem:[#allocation2 + $0x90] sm:$0xff] %vm830, %v816
        %850 = vst.msk [vmem:[#allocation2 + $0x98] sm:$0xff] %vm830, %v817
        %851 = vst.msk [vmem:[#allocation2 + $0xa0] sm:$0xff] %vm830, %v818
        %852 = vst.msk [vmem:[#allocation2 + $0xa8] sm:$0xff] %vm830, %v819
        %853 = vst.msk [vmem:[#allocation2 + $0xb0] sm:$0xff] %vm830, %v820
        %854 = vst.msk [vmem:[#allocation2 + $0xb8] sm:$0xff] %vm830, %v821
        %855 = vst.msk [vmem:[#allocation2 + $0xc0] sm:$0xff] %vm830, %v822
        %856 = vst.msk [vmem:[#allocation2 + $0xc8] sm:$0xff] %vm830, %v823
        %857 = vst.msk [vmem:[#allocation2 + $0xd0] sm:$0xff] %vm830, %v824
        %858 = vst.msk [vmem:[#allocation2 + $0xd8] sm:$0xff] %vm830, %v825
        %859 = vst.msk [vmem:[#allocation2 + $0xe0] sm:$0xff] %vm830, %v826
        %860 = vst.msk [vmem:[#allocation2 + $0xe8] sm:$0xff] %vm830, %v827
        %861 = vst.msk [vmem:[#allocation2 + $0xf0] sm:$0xff] %vm830, %v828
        %862 = vst.msk [vmem:[#allocation2 + $0xf8] sm:$0xff] %vm830, %v829
        // Predicated region
        $region37: #{conv_bn.1} parent=31 // pred_check
          %p863 = pneg %p260
        $region38: #{conv_bn.1} parent=31 // pred_check_branch
          %865 = sbr.rel (%p863) target = $region40
        $region39: #{conv_bn.1} parent=31 // pred_region
          %v866 = vld [vmem:[#allocation2] sm:$0xff]
          %v867 = vld [vmem:[#allocation2 + $0x8] sm:$0xff]
          %v868 = vld [vmem:[#allocation2 + $0x10] sm:$0xff]
          %v869 = vld [vmem:[#allocation2 + $0x18] sm:$0xff]
          %v870 = vld [vmem:[#allocation2 + $0x20] sm:$0xff]
          %v871 = vld [vmem:[#allocation2 + $0x28] sm:$0xff]
          %v872 = vld [vmem:[#allocation2 + $0x30] sm:$0xff]
          %v873 = vld [vmem:[#allocation2 + $0x38] sm:$0xff]
          %v874 = vld [vmem:[#allocation2 + $0x40] sm:$0xff]
          %v875 = vld [vmem:[#allocation2 + $0x48] sm:$0xff]
          %v876 = vld [vmem:[#allocation2 + $0x50] sm:$0xff]
          %v877 = vld [vmem:[#allocation2 + $0x58] sm:$0xff]
          %v878 = vld [vmem:[#allocation2 + $0x60] sm:$0xff]
          %v879 = vld [vmem:[#allocation2 + $0x68] sm:$0xff]
          %v880 = vld [vmem:[#allocation2 + $0x70] sm:$0xff]
          %v881 = vld [vmem:[#allocation2 + $0x78] sm:$0xff]
          %v882 = vld [vmem:[#allocation2 + $0x80] sm:$0xff]
          %v883 = vld [vmem:[#allocation2 + $0x88] sm:$0xff]
          %v884 = vld [vmem:[#allocation2 + $0x90] sm:$0xff]
          %v885 = vld [vmem:[#allocation2 + $0x98] sm:$0xff]
          %v886 = vld [vmem:[#allocation2 + $0xa0] sm:$0xff]
          %v887 = vld [vmem:[#allocation2 + $0xa8] sm:$0xff]
          %v888 = vld [vmem:[#allocation2 + $0xb0] sm:$0xff]
          %v889 = vld [vmem:[#allocation2 + $0xb8] sm:$0xff]
          %v890 = vld [vmem:[#allocation2 + $0xc0] sm:$0xff]
          %v891 = vld [vmem:[#allocation2 + $0xc8] sm:$0xff]
          %v892 = vld [vmem:[#allocation2 + $0xd0] sm:$0xff]
          %v893 = vld [vmem:[#allocation2 + $0xd8] sm:$0xff]
          %v894 = vld [vmem:[#allocation2 + $0xe0] sm:$0xff]
          %v895 = vld [vmem:[#allocation2 + $0xe8] sm:$0xff]
          %v896 = vld [vmem:[#allocation2 + $0xf0] sm:$0xff]
          %v897 = vld [vmem:[#allocation2 + $0xf8] sm:$0xff]
          %v898 = vld [vmem:[%s257] sm:$0x1]
          %v900 = vlaneseq
          %v901 = vshrl.u32 %v900, 7
          %v902 = vsub.s32 0, %v901
          %v903 = vrot.slane %v898, %v902
          %v905 = vadd.f32 %v866, %v903
          %v906 = vadd.f32 %v867, %v903
          %v907 = vadd.f32 %v868, %v903
          %v908 = vadd.f32 %v869, %v903
          %v909 = vadd.f32 %v870, %v903
          %v910 = vadd.f32 %v871, %v903
          %v911 = vadd.f32 %v872, %v903
          %v912 = vadd.f32 %v873, %v903
          %v913 = vadd.f32 %v874, %v903
          %v914 = vadd.f32 %v875, %v903
          %v915 = vadd.f32 %v876, %v903
          %v916 = vadd.f32 %v877, %v903
          %v917 = vadd.f32 %v878, %v903
          %v918 = vadd.f32 %v879, %v903
          %v919 = vadd.f32 %v880, %v903
          %v920 = vadd.f32 %v881, %v903
          %v921 = vadd.f32 %v882, %v903
          %v922 = vadd.f32 %v883, %v903
          %v923 = vadd.f32 %v884, %v903
          %v924 = vadd.f32 %v885, %v903
          %v925 = vadd.f32 %v886, %v903
          %v926 = vadd.f32 %v887, %v903
          %v927 = vadd.f32 %v888, %v903
          %v928 = vadd.f32 %v889, %v903
          %v929 = vadd.f32 %v890, %v903
          %v930 = vadd.f32 %v891, %v903
          %v931 = vadd.f32 %v892, %v903
          %v932 = vadd.f32 %v893, %v903
          %v933 = vadd.f32 %v894, %v903
          %v934 = vadd.f32 %v895, %v903
          %v935 = vadd.f32 %v896, %v903
          %v936 = vadd.f32 %v897, %v903
          %v937 = vmax.f32 %v905, 0.0
          %v938 = vmax.f32 %v906, 0.0
          %v939 = vmax.f32 %v907, 0.0
          %v940 = vmax.f32 %v908, 0.0
          %v941 = vmax.f32 %v909, 0.0
          %v942 = vmax.f32 %v910, 0.0
          %v943 = vmax.f32 %v911, 0.0
          %v944 = vmax.f32 %v912, 0.0
          %v945 = vmax.f32 %v913, 0.0
          %v946 = vmax.f32 %v914, 0.0
          %v947 = vmax.f32 %v915, 0.0
          %v948 = vmax.f32 %v916, 0.0
          %v949 = vmax.f32 %v917, 0.0
          %v950 = vmax.f32 %v918, 0.0
          %v951 = vmax.f32 %v919, 0.0
          %v952 = vmax.f32 %v920, 0.0
          %v953 = vmax.f32 %v921, 0.0
          %v954 = vmax.f32 %v922, 0.0
          %v955 = vmax.f32 %v923, 0.0
          %v956 = vmax.f32 %v924, 0.0
          %v957 = vmax.f32 %v925, 0.0
          %v958 = vmax.f32 %v926, 0.0
          %v959 = vmax.f32 %v927, 0.0
          %v960 = vmax.f32 %v928, 0.0
          %v961 = vmax.f32 %v929, 0.0
          %v962 = vmax.f32 %v930, 0.0
          %v963 = vmax.f32 %v931, 0.0
          %v964 = vmax.f32 %v932, 0.0
          %v965 = vmax.f32 %v933, 0.0
          %v966 = vmax.f32 %v934, 0.0
          %v967 = vmax.f32 %v935, 0.0
          %v968 = vmax.f32 %v936, 0.0
          %v969 = vpack.c.bf16 %v938, %v937
          %v970 = vpack.c.bf16 %v940, %v939
          %v971 = vpack.c.bf16 %v942, %v941
          %v972 = vpack.c.bf16 %v944, %v943
          %v973 = vpack.c.bf16 %v946, %v945
          %v974 = vpack.c.bf16 %v948, %v947
          %v975 = vpack.c.bf16 %v950, %v949
          %v976 = vpack.c.bf16 %v952, %v951
          %v977 = vpack.c.bf16 %v954, %v953
          %v978 = vpack.c.bf16 %v956, %v955
          %v979 = vpack.c.bf16 %v958, %v957
          %v980 = vpack.c.bf16 %v960, %v959
          %v981 = vpack.c.bf16 %v962, %v961
          %v982 = vpack.c.bf16 %v964, %v963
          %v983 = vpack.c.bf16 %v966, %v965
          %v984 = vpack.c.bf16 %v968, %v967
          %v1001 = vunpack.c.l.b16 %v969
          %v1002 = vunpack.c.h.b16 %v969
          %v1003 = vunpack.c.l.b16 %v970
          %v1004 = vunpack.c.h.b16 %v970
          %v1005 = vunpack.c.l.b16 %v971
          %v1006 = vunpack.c.h.b16 %v971
          %v1007 = vunpack.c.l.b16 %v972
          %v1008 = vunpack.c.h.b16 %v972
          %v1009 = vunpack.c.l.b16 %v973
          %v1010 = vunpack.c.h.b16 %v973
          %v1011 = vunpack.c.l.b16 %v974
          %v1012 = vunpack.c.h.b16 %v974
          %v1013 = vunpack.c.l.b16 %v975
          %v1014 = vunpack.c.h.b16 %v975
          %v1015 = vunpack.c.l.b16 %v976
          %v1016 = vunpack.c.h.b16 %v976
          %v1017 = vunpack.c.l.b16 %v977
          %v1018 = vunpack.c.h.b16 %v977
          %v1019 = vunpack.c.l.b16 %v978
          %v1020 = vunpack.c.h.b16 %v978
          %v1021 = vunpack.c.l.b16 %v979
          %v1022 = vunpack.c.h.b16 %v979
          %v1023 = vunpack.c.l.b16 %v980
          %v1024 = vunpack.c.h.b16 %v980
          %v1025 = vunpack.c.l.b16 %v981
          %v1026 = vunpack.c.h.b16 %v981
          %v1027 = vunpack.c.l.b16 %v982
          %v1028 = vunpack.c.h.b16 %v982
          %v1029 = vunpack.c.l.b16 %v983
          %v1030 = vunpack.c.h.b16 %v983
          %v1031 = vunpack.c.l.b16 %v984
          %v1032 = vunpack.c.h.b16 %v984
          %v1033 = vpack.c.b16 %v1001, %v1001
          %v1034 = vpack.c.b16 %v1002, %v1002
          %v1035 = vpack.c.b16 %v1003, %v1003
          %v1036 = vpack.c.b16 %v1004, %v1004
          %v1037 = vpack.c.b16 %v1005, %v1005
          %v1038 = vpack.c.b16 %v1006, %v1006
          %v1039 = vpack.c.b16 %v1007, %v1007
          %v1040 = vpack.c.b16 %v1008, %v1008
          %v1041 = vpack.c.b16 %v1009, %v1009
          %v1042 = vpack.c.b16 %v1010, %v1010
          %v1043 = vpack.c.b16 %v1011, %v1011
          %v1044 = vpack.c.b16 %v1012, %v1012
          %v1045 = vpack.c.b16 %v1013, %v1013
          %v1046 = vpack.c.b16 %v1014, %v1014
          %v1047 = vpack.c.b16 %v1015, %v1015
          %v1048 = vpack.c.b16 %v1016, %v1016
          %v1049 = vpack.c.b16 %v1017, %v1017
          %v1050 = vpack.c.b16 %v1018, %v1018
          %v1051 = vpack.c.b16 %v1019, %v1019
          %v1052 = vpack.c.b16 %v1020, %v1020
          %v1053 = vpack.c.b16 %v1021, %v1021
          %v1054 = vpack.c.b16 %v1022, %v1022
          %v1055 = vpack.c.b16 %v1023, %v1023
          %v1056 = vpack.c.b16 %v1024, %v1024
          %v1057 = vpack.c.b16 %v1025, %v1025
          %v1058 = vpack.c.b16 %v1026, %v1026
          %v1059 = vpack.c.b16 %v1027, %v1027
          %v1060 = vpack.c.b16 %v1028, %v1028
          %v1061 = vpack.c.b16 %v1029, %v1029
          %v1062 = vpack.c.b16 %v1030, %v1030
          %v1063 = vpack.c.b16 %v1031, %v1031
          %v1064 = vpack.c.b16 %v1032, %v1032
          %vm1097 = vcmask 519168
          %1098 = vst.msk [vmem:[%s233] sm:$0xf] %vm1097, %v1033
          %1099 = vst.msk [vmem:[%s233 + $0x4] sm:$0xf] %vm1097, %v1034
          %1100 = vst.msk [vmem:[%s233 + $0x8] sm:$0xf] %vm1097, %v1035
          %1101 = vst.msk [vmem:[%s233 + $0xc] sm:$0xf] %vm1097, %v1036
          %1102 = vst.msk [vmem:[%s233 + $0x10] sm:$0xf] %vm1097, %v1037
          %1103 = vst.msk [vmem:[%s233 + $0x14] sm:$0xf] %vm1097, %v1038
          %1104 = vst.msk [vmem:[%s233 + $0x18] sm:$0xf] %vm1097, %v1039
          %1105 = vst.msk [vmem:[%s233 + $0x1c] sm:$0xf] %vm1097, %v1040
          %1106 = vst.msk [vmem:[%s233 + $0x20] sm:$0xf] %vm1097, %v1041
          %1107 = vst.msk [vmem:[%s233 + $0x24] sm:$0xf] %vm1097, %v1042
          %1108 = vst.msk [vmem:[%s233 + $0x28] sm:$0xf] %vm1097, %v1043
          %1109 = vst.msk [vmem:[%s233 + $0x2c] sm:$0xf] %vm1097, %v1044
          %1110 = vst.msk [vmem:[%s233 + $0x30] sm:$0xf] %vm1097, %v1045
          %1111 = vst.msk [vmem:[%s233 + $0x34] sm:$0xf] %vm1097, %v1046
          %1112 = vst.msk [vmem:[%s233 + $0x38] sm:$0xf] %vm1097, %v1047
          %1113 = vst.msk [vmem:[%s233 + $0x3c] sm:$0xf] %vm1097, %v1048
          %1114 = vst.msk [vmem:[%s233 + $0x40] sm:$0xf] %vm1097, %v1049
          %1115 = vst.msk [vmem:[%s233 + $0x44] sm:$0xf] %vm1097, %v1050
          %1116 = vst.msk [vmem:[%s233 + $0x48] sm:$0xf] %vm1097, %v1051
          %1117 = vst.msk [vmem:[%s233 + $0x4c] sm:$0xf] %vm1097, %v1052
          %1118 = vst.msk [vmem:[%s233 + $0x50] sm:$0xf] %vm1097, %v1053
          %1119 = vst.msk [vmem:[%s233 + $0x54] sm:$0xf] %vm1097, %v1054
          %1120 = vst.msk [vmem:[%s233 + $0x58] sm:$0xf] %vm1097, %v1055
          %1121 = vst.msk [vmem:[%s233 + $0x5c] sm:$0xf] %vm1097, %v1056
          %1122 = vst.msk [vmem:[%s233 + $0x60] sm:$0xf] %vm1097, %v1057
          %1123 = vst.msk [vmem:[%s233 + $0x64] sm:$0xf] %vm1097, %v1058
          %1124 = vst.msk [vmem:[%s233 + $0x68] sm:$0xf] %vm1097, %v1059
          %1125 = vst.msk [vmem:[%s233 + $0x6c] sm:$0xf] %vm1097, %v1060
          %1126 = vst.msk [vmem:[%s233 + $0x70] sm:$0xf] %vm1097, %v1061
          %1127 = vst.msk [vmem:[%s233 + $0x74] sm:$0xf] %vm1097, %v1062
          %1128 = vst.msk [vmem:[%s233 + $0x78] sm:$0xf] %vm1097, %v1063
          %1129 = vst.msk [vmem:[%s233 + $0x7c] sm:$0xf] %vm1097, %v1064
        $region40: #{conv_bn.1} parent=31 // pred_fallthru
          _
        %s1130 = sand.u32 %s128, 1
        %s1131 = scalar_lea.sflag [#allocation4], %s1130
        %s1132 = sand.u32 %s128, 1
        %s1133 = smul.addr %s1132, 128
        %s1134 = scalar_lea.vmem [#allocation3], %s1133
        // Predicated region
        $region41: #{conv_bn.1} parent=31 // pred_check
          %p1135 = pneg %p138
        $region42: #{conv_bn.1} parent=31 // pred_check_branch
          %1137 = sbr.rel (%p1135) target = $region44
        $region43: #{conv_bn.1} parent=31 // pred_region
          %s1138 = smul.u32 32, %s22
          %s1140 = ssub.s32 2048, 2048
          %1141 = vsyncadd %s1131, %s1140
          %s1142 = sadd.s32 %s23, %s1138
          %s1143 = smul.addr %s1142, 64
          %s1144 = scalar_lea.hbm %s3, %s1143
          %s1145 = sshll.u32 %s1134, 4
          %s1146 = int_to_ptr.vmem [resolvable:$true] %s1145
          %1151 = dma.vmem_to_hbm [thread:$0]  %s1146, 2048, %s1144, %s1131, 64, 64, 4
        $region44: #{conv_bn.1} parent=31 // pred_fallthru
          _
      $region32: #{conv_bn.1} parent=5 // pred_fallthru
        _
      %p1152 = scmp.le.s32.totalorder 2, %s12
      // Predicated region
      $region45: #{conv_bn.1} parent=5 // pred_check
        %p1153 = pneg %p1152
      $region46: #{conv_bn.1} parent=5 // pred_check_branch
        %1155 = sbr.rel (%p1153) target = $region48
      $region47: #{conv_bn.1} parent=5 // pred_region
        %s1156 = ssub.s32 %s12, 2
        // Predicated region
        $region49: #{conv_bn.1} parent=47 // pred_check
          %p1157 = pneg %p144
        $region50: #{conv_bn.1} parent=47 // pred_check_branch
          %1159 = sbr.rel (%p1157) target = $region52
        $region51: #{conv_bn.1} parent=47 // pred_region
          %s1160 = sand.u32 %s129, 1
          %s1161 = scalar_lea.sflag [#allocation4], %s1160
          %s1162 = sand.u32 %s129, 1
          %s1163 = smul.addr %s1162, 128
          %s1164 = scalar_lea.vmem [#allocation3], %s1163
          %1165 = dma.done %s1161, 2048
        $region52: #{conv_bn.1} parent=47 // pred_fallthru
          _
      $region48: #{conv_bn.1} parent=5 // pred_fallthru
        _
    $region6: #{conv_bn.1} parent=1 // loop_footer
      %s16 = sadd.s32 1, %s12
    $region7: #{conv_bn.1} parent=1 // loop_footer_branch
      %11 = sbr.rel target = $region3
    $region8: #{conv_bn.1} parent=1 // loop_exit
      _
    %1166 = vsyncpa [#allocation4], 1
    %s1167 = scalar_lea.sflag [#allocation4], 1
    %1168 = vsyncpa %s1167, 1

</llo_original>
